<compile_context>
chip_gen: v6e
topology: v6e:2x2x1
jax: 0.10.0
libtpu: 0.0.40
codegen_flags: <defaults>
</compile_context>

<pallas_src>
import functools

import jax
import jax.numpy as jnp
import numpy as np
from jax.experimental import pallas as pl
from jax.experimental.pallas import tpu as pltpu

ALPHA = 1.0          # module default (set_alpha never called here)
BN_EPS = 1e-5
NORM_EPS = 1e-12


def _round_up(n, m):
    return ((n + m - 1) // m) * m


def _pad2(a, r, c):
    pr, pc = r - a.shape[0], c - a.shape[1]
    if pr == 0 and pc == 0:
        return a
    return jnp.pad(a, ((0, pr), (0, pc)))


def _vmem_budget():
    """Generation-aware (budget, vmem_limit) in bytes."""
    try:
        cap = int(pltpu.get_tpu_info().vmem_capacity_bytes)
    except Exception:
        cap = 64 * 1024 * 1024          # conservative (v7x-sized) fallback
    return int(cap * 0.60), int(cap * 0.75)


def _pick_tile_h(Bp, Fp, Cp, budget_bytes):
    """Largest H-tile whose true live VMEM footprint fits the budget."""
    resident = 2 * Bp * Fp * 2          # x block (bf16), counted double-buffered
    resident += Bp * Fp * 2             # normalized-x scratch (bf16)
    resident += 2 * Bp * Cp * 4         # resident f32 output/accumulator block
    resident += 2 * Cp * 4              # b2 block
    for t in (2048, 1024, 512, 256, 128):
        streamed = 2 * 2 * (Fp * t + t * Cp)   # w1 / w2 bf16, double-buffered
        streamed += 2 * 2 * t * 4              # stacked gamma/beta (2, t) f32
        live = 3 * Bp * t * 4                  # h intermediate + BN temporaries
        if resident + streamed + live <= budget_bytes:
            return t
    return 128


def txtnet_kernel(b_ref, x_ref, w1_ref, gb_ref, w2_ref, b2_ref, out_ref, xn_ref):
    k = pl.program_id(0)
    nk = pl.num_programs(0)

    # ---- step 0: L2-normalize x once (f32 math, bf16 result), zero output ----
    @pl.when(k == 0)
    def _():
        x = x_ref[...].astype(jnp.float32)                         # (Bp, Fp)
        sq = jnp.sum(x * x, axis=1, keepdims=True)                 # (Bp, 1)
        inv = jax.lax.rsqrt(jnp.maximum(sq, NORM_EPS * NORM_EPS))
        xn_ref[...] = (x * inv).astype(xn_ref.dtype)
        out_ref[...] = jnp.zeros_like(out_ref)

    # ---- Linear 1 for this H-tile (bias omitted: cancelled by batch-stat BN) --
    h = jnp.dot(xn_ref[...], w1_ref[...], preferred_element_type=jnp.float32)

    # ---- BatchNorm1d, batch statistics over the true batch.  Padded rows of
    #      h are exactly zero (no bias), so unmasked sums / true-B are exact. --
    inv_b = 1.0 / b_ref[0].astype(jnp.float32)
    mean = jnp.sum(h, axis=0, keepdims=True) * inv_b               # (1, tH)
    ex2 = jnp.sum(h * h, axis=0, keepdims=True) * inv_b
    var = jnp.maximum(ex2 - mean * mean, 0.0)                      # biased var

    scale = gb_ref[0:1, :] * jax.lax.rsqrt(var + BN_EPS)           # gamma row
    shift = gb_ref[1:2, :] - mean * scale                          # beta row
    h = jnp.maximum(h * scale + shift, 0.0)                        # BN + ReLU

    # ---- Linear 2 partial product, accumulated into the resident out block ---
    out_ref[...] += jnp.dot(h.astype(w2_ref.dtype), w2_ref[...],
                            preferred_element_type=jnp.float32)

    # ---- last step: bias, tanh, in place (lane-dense f32 block) -------------
    @pl.when(k == nk - 1)
    def _():
        out_ref[...] = jnp.tanh(ALPHA * (out_ref[...] + b2_ref[...]))


def prepare_params(params, *, batch_hint=256, tile_h=None):
    """One-time padding + bf16 casting of the weights (cache and reuse)."""
    F, H = params["w1"].shape
    C = params["w2"].shape[1]
    Fp = _round_up(F, 128)
    Cp = _round_up(C, 128)

    budget, vmem_limit = _vmem_budget()
    if tile_h is None:
        tile_h = _pick_tile_h(_round_up(batch_hint, 16), Fp, Cp, budget)
    tile_h = min(tile_h, _round_up(H, 128))        # clamp tile to the problem
    Hp = _round_up(H, tile_h)

    gb = jnp.concatenate([_pad2(params["gamma"], 1, Hp),
                          _pad2(params["beta"], 1, Hp)], axis=0)
    return {
        # NOTE: b1 is intentionally not prepared — batch-stat BN cancels it.
        "w1": _pad2(params["w1"], Fp, Hp).astype(jnp.bfloat16),
        "gb": gb.astype(jnp.float32),
        "w2": _pad2(params["w2"], Hp, Cp).astype(jnp.bfloat16),
        "b2": _pad2(params["b2"], 1, Cp).astype(jnp.float32),
        "F": F, "H": H, "C": C, "Fp": Fp, "Hp": Hp, "Cp": Cp,
        "tile_h": tile_h, "vmem_limit": vmem_limit,
    }


@functools.partial(jax.jit, static_argnames=())
def _identity(x):
    return x


def txtnet_forward(x, prep):
    """x: (B, txt_feat_len) float. prep: output of prepare_params()."""
    B, F = x.shape
    assert F == prep["F"], "feature dim mismatch with prepared params"
    Bp = _round_up(B, 16)
    Fp, Hp, Cp = prep["Fp"], prep["Hp"], prep["Cp"]
    tile_h = prep["tile_h"]
    n_h = Hp // tile_h

    xp = _pad2(x, Bp, Fp).astype(jnp.bfloat16)     # per-call padding of x only
    b_true = jnp.array([B], dtype=jnp.int32)       # SMEM scalar (no recompile
                                                   # triggered by B itself)
    out = pl.pallas_call(
        txtnet_kernel,
        out_shape=jax.ShapeDtypeStruct((Bp, Cp), jnp.float32),
        grid_spec=pltpu.PrefetchScalarGridSpec(
            num_scalar_prefetch=1,
            grid=(n_h,),
            in_specs=[
                pl.BlockSpec((Bp, Fp), lambda k, b: (0, 0)),       # x (resident)
                pl.BlockSpec((Fp, tile_h), lambda k, b: (0, k)),   # w1 (streamed)
                pl.BlockSpec((2, tile_h), lambda k, b: (0, k)),    # gamma/beta
                pl.BlockSpec((tile_h, Cp), lambda k, b: (k, 0)),   # w2 (streamed)
                pl.BlockSpec((1, Cp), lambda k, b: (0, 0)),        # b2 (resident)
            ],
            out_specs=pl.BlockSpec((Bp, Cp), lambda k, b: (0, 0)),
            scratch_shapes=[
                pltpu.VMEM((Bp, Fp), jnp.bfloat16),   # normalized x (reused)
            ]),
        compiler_params=pltpu.CompilerParams(
            dimension_semantics=("arbitrary",),
            vmem_limit_bytes=prep["vmem_limit"]),
    )(b_true, xp, prep["w1"], prep["gb"], prep["w2"], prep["b2"])

    return out[:B, :prep["C"]]


def init_params(key, txt_feat_len, hidden_len, code_len):
    """Deterministic synthetic init (PyTorch-style uniform +-1/sqrt(fan_in))."""
    k1, k2, k3, k4 = jax.random.split(key, 4)
    lim1 = 1.0 / np.sqrt(txt_feat_len)
    lim2 = 1.0 / np.sqrt(hidden_len)
    return {
        # Linear weights stored as (in, out) so the kernel does x @ W directly.
        "w1": jax.random.uniform(k1, (txt_feat_len, hidden_len),
                                 jnp.float32, -lim1, lim1),
        "b1": jax.random.uniform(k2, (1, hidden_len), jnp.float32, -lim1, lim1),
        "gamma": jnp.ones((1, hidden_len), jnp.float32),   # BN weight
        "beta": jnp.zeros((1, hidden_len), jnp.float32),   # BN bias
        "w2": jax.random.uniform(k3, (hidden_len, code_len),
                                 jnp.float32, -lim2, lim2),
        "b2": jax.random.uniform(k4, (1, code_len), jnp.float32, -lim2, lim2),
    }


def reference_forward(x, p):
    """Pure-JAX f32 reference of the same forward (includes b1 — the kernel
    relies on its exact cancellation under batch-statistic BatchNorm)."""
    xn = x / jnp.maximum(jnp.linalg.norm(x, axis=1, keepdims=True), NORM_EPS)
    h = xn @ p["w1"] + p["b1"]
    mean = jnp.mean(h, axis=0, keepdims=True)
    var = jnp.mean((h - mean) ** 2, axis=0, keepdims=True)
    h = (h - mean) / jnp.sqrt(var + BN_EPS) * p["gamma"] + p["beta"]
    h = jnp.maximum(h, 0.0)
    return jnp.tanh(ALPHA * (h @ p["w2"] + p["b2"]))


if __name__ == "__main__":
    # Small shapes consistent with the module: batch=8 texts, feat=32,
    # hidden=32, code_len=16.
    batch, txt_feat_len, hidden_len, code_len = 8, 32, 32, 16

    key = jax.random.PRNGKey(0)
    kx, kp = jax.random.split(key)
    x = jax.random.normal(kx, (batch, txt_feat_len), jnp.float32)
    params = init_params(kp, txt_feat_len, hidden_len, code_len)

    prep = prepare_params(params, batch_hint=batch)   # one-time weight prep
    code = jax.block_until_ready(txtnet_forward(x, prep))
    ref = jax.block_until_ready(reference_forward(x, params))

    # bf16 x / bf16 MXU inputs (f32 accumulate) vs pure-f32 reference.
    np.testing.assert_allclose(np.asarray(code), np.asarray(ref),
                               rtol=0.0, atol=4e-2)
    print("KERNEL_OK")
</pallas_src>

<mosaic_0001>
module attributes {stable_mosaic.version = 11 : i64} {
  func.func @txtnet_kernel(%arg0: i32, %arg1: memref<1xi32, #tpu.memory_space<smem>>, %arg2: memref<16x128xbf16, #tpu.memory_space<vmem>>, %arg3: memref<128x128xbf16, #tpu.memory_space<vmem>>, %arg4: memref<2x128xf32, #tpu.memory_space<vmem>>, %arg5: memref<128x128xbf16, #tpu.memory_space<vmem>>, %arg6: memref<1x128xf32, #tpu.memory_space<vmem>>, %arg7: memref<16x128xf32, #tpu.memory_space<vmem>>, %arg8: memref<16x128xbf16, #tpu.memory_space<vmem>>) attributes {dimension_semantics = [#tpu.dimension_semantics<arbitrary>], iteration_bounds = array<i64: 1>, scalar_prefetch = 1 : i64, scratch_operands = 1 : i64, tpu.core_type = #tpu.core_type<tc>, window_params = [{pipeline_mode = #tpu.pipeline_mode<synchronous>, transform_indices = @transform_0, window_bounds = array<i64: 16, 128>}, {transform_indices = @transform_1, window_bounds = array<i64: 128, 128>}, {transform_indices = @transform_2, window_bounds = array<i64: 2, 128>}, {transform_indices = @transform_3, window_bounds = array<i64: 128, 128>}, {pipeline_mode = #tpu.pipeline_mode<synchronous>, transform_indices = @transform_4, window_bounds = array<i64: 1, 128>}, {pipeline_mode = #tpu.pipeline_mode<synchronous>, transform_indices = @transform_5, window_bounds = array<i64: 16, 128>}]} {
    %c0_i32 = arith.constant 0 : i32
    %0 = arith.cmpi eq, %arg0, %c0_i32 : i32
    %1 = arith.extui %0 : i1 to i32
    %c0_i32_0 = arith.constant 0 : i32
    %2 = arith.cmpi ne, %1, %c0_i32_0 : i32
    scf.if %2 {
      %c0_23 = arith.constant 0 : index
      %c0_24 = arith.constant 0 : index
      %45 = vector.load %arg2[%c0_23, %c0_24] : memref<16x128xbf16, #tpu.memory_space<vmem>>, vector<16x128xbf16>
      %46 = arith.extf %45 : vector<16x128xbf16> to vector<16x128xf32>
      %47 = arith.mulf %46, %46 : vector<16x128xf32>
      %cst_25 = arith.constant dense<0.000000e+00> : vector<16xf32>
      %48 = vector.multi_reduction <add>, %47, %cst_25 [1] : vector<16x128xf32> to vector<16xf32>
      %49 = vector.shape_cast %48 : vector<16xf32> to vector<16x1xf32>
      %cst_26 = arith.constant 1.000000e-24 : f32
      %50 = vector.broadcast %cst_26 : f32 to vector<16x1xf32>
      %51 = arith.maximumf %49, %50 : vector<16x1xf32>
      %52 = math.rsqrt %51 : vector<16x1xf32>
      %53 = vector.broadcast %52 : vector<16x1xf32> to vector<16x128xf32>
      %54 = arith.mulf %46, %53 : vector<16x128xf32>
      %55 = arith.truncf %54 : vector<16x128xf32> to vector<16x128xbf16>
      %c0_27 = arith.constant 0 : index
      %c0_28 = arith.constant 0 : index
      %56 = vector.load %arg8[%c0_27, %c0_28] : memref<16x128xbf16, #tpu.memory_space<vmem>>, vector<16x128xbf16>
      tpu.vector_store %arg8[%c0_27, %c0_28], %55 {strides = array<i32>} : memref<16x128xbf16, #tpu.memory_space<vmem>>, vector<16x128xbf16>,
      %cst_29 = arith.constant 0.000000e+00 : f32
      %57 = vector.broadcast %cst_29 : f32 to vector<16x128xf32>
      %c0_30 = arith.constant 0 : index
      %c0_31 = arith.constant 0 : index
      %58 = vector.load %arg7[%c0_30, %c0_31] : memref<16x128xf32, #tpu.memory_space<vmem>>, vector<16x128xf32>
      tpu.vector_store %arg7[%c0_30, %c0_31], %57 {strides = array<i32>} : memref<16x128xf32, #tpu.memory_space<vmem>>, vector<16x128xf32>,
    } else {
    }
    %c0 = arith.constant 0 : index
    %c0_1 = arith.constant 0 : index
    %3 = vector.load %arg8[%c0, %c0_1] : memref<16x128xbf16, #tpu.memory_space<vmem>>, vector<16x128xbf16>
    %c0_2 = arith.constant 0 : index
    %c0_3 = arith.constant 0 : index
    %4 = vector.load %arg3[%c0_2, %c0_3] : memref<128x128xbf16, #tpu.memory_space<vmem>>, vector<128x128xbf16>
    %cst = arith.constant dense<0.000000e+00> : vector<16x128xf32>
    %5 = tpu.matmul %3, %4, %cst {dimension_numbers = #tpu.dot_dimension_numbers<[1], [0], [0], [1], [0, 0, 1, 1], [], []>} : vector<16x128xbf16>, vector<128x128xbf16>, vector<16x128xf32> -> vector<16x128xf32>
    %c0_4 = arith.constant 0 : index
    %6 = memref.load %arg1[%c0_4] : memref<1xi32, #tpu.memory_space<smem>>
    %7 = arith.sitofp %6 : i32 to f32
    %cst_5 = arith.constant 1.000000e+00 : f32
    %8 = arith.divf %cst_5, %7 : f32
    %cst_6 = arith.constant dense<0.000000e+00> : vector<128xf32>
    %9 = vector.multi_reduction <add>, %5, %cst_6 [0] : vector<16x128xf32> to vector<128xf32>
    %10 = vector.shape_cast %9 : vector<128xf32> to vector<1x128xf32>
    %11 = vector.broadcast %8 : f32 to vector<1x128xf32>
    %12 = arith.mulf %10, %11 : vector<1x128xf32>
    %13 = arith.mulf %5, %5 : vector<16x128xf32>
    %cst_7 = arith.constant dense<0.000000e+00> : vector<128xf32>
    %14 = vector.multi_reduction <add>, %13, %cst_7 [0] : vector<16x128xf32> to vector<128xf32>
    %15 = vector.shape_cast %14 : vector<128xf32> to vector<1x128xf32>
    %16 = vector.broadcast %8 : f32 to vector<1x128xf32>
    %17 = arith.mulf %15, %16 : vector<1x128xf32>
    %18 = arith.mulf %12, %12 : vector<1x128xf32>
    %19 = arith.subf %17, %18 : vector<1x128xf32>
    %cst_8 = arith.constant 0.000000e+00 : f32
    %20 = vector.broadcast %cst_8 : f32 to vector<1x128xf32>
    %21 = arith.maximumf %19, %20 : vector<1x128xf32>
    %c0_9 = arith.constant 0 : index
    %c0_10 = arith.constant 0 : index
    %22 = vector.load %arg4[%c0_9, %c0_10] : memref<2x128xf32, #tpu.memory_space<vmem>>, vector<1x128xf32>
    %cst_11 = arith.constant 9.99999974E-6 : f32
    %23 = vector.broadcast %cst_11 : f32 to vector<1x128xf32>
    %24 = arith.addf %21, %23 : vector<1x128xf32>
    %25 = math.rsqrt %24 : vector<1x128xf32>
    %26 = arith.mulf %22, %25 : vector<1x128xf32>
    %c1 = arith.constant 1 : index
    %c0_12 = arith.constant 0 : index
    %27 = vector.load %arg4[%c1, %c0_12] : memref<2x128xf32, #tpu.memory_space<vmem>>, vector<1x128xf32>
    %28 = arith.mulf %12, %26 : vector<1x128xf32>
    %29 = arith.subf %27, %28 : vector<1x128xf32>
    %30 = vector.broadcast %26 : vector<1x128xf32> to vector<16x128xf32>
    %31 = arith.mulf %5, %30 : vector<16x128xf32>
    %32 = vector.broadcast %29 : vector<1x128xf32> to vector<16x128xf32>
    %33 = arith.addf %31, %32 : vector<16x128xf32>
    %cst_13 = arith.constant 0.000000e+00 : f32
    %34 = vector.broadcast %cst_13 : f32 to vector<16x128xf32>
    %35 = arith.maximumf %33, %34 : vector<16x128xf32>
    %c0_14 = arith.constant 0 : index
    %c0_15 = arith.constant 0 : index
    %36 = vector.load %arg7[%c0_14, %c0_15] : memref<16x128xf32, #tpu.memory_space<vmem>>, vector<16x128xf32>
    %37 = arith.truncf %35 : vector<16x128xf32> to vector<16x128xbf16>
    %c0_16 = arith.constant 0 : index
    %c0_17 = arith.constant 0 : index
    %38 = vector.load %arg5[%c0_16, %c0_17] : memref<128x128xbf16, #tpu.memory_space<vmem>>, vector<128x128xbf16>
    %cst_18 = arith.constant dense<0.000000e+00> : vector<16x128xf32>
    %39 = tpu.matmul %37, %38, %cst_18 {dimension_numbers = #tpu.dot_dimension_numbers<[1], [0], [0], [1], [0, 0, 1, 1], [], []>} : vector<16x128xbf16>, vector<128x128xbf16>, vector<16x128xf32> -> vector<16x128xf32>
    %40 = arith.addf %36, %39 : vector<16x128xf32>
    %c0_19 = arith.constant 0 : index
    %c0_20 = arith.constant 0 : index
    %41 = vector.load %arg7[%c0_19, %c0_20] : memref<16x128xf32, #tpu.memory_space<vmem>>, vector<16x128xf32>
    tpu.vector_store %arg7[%c0_19, %c0_20], %40 {strides = array<i32>} : memref<16x128xf32, #tpu.memory_space<vmem>>, vector<16x128xf32>,
    %c0_i32_21 = arith.constant 0 : i32
    %42 = arith.cmpi eq, %arg0, %c0_i32_21 : i32
    %43 = arith.extui %42 : i1 to i32
    %c0_i32_22 = arith.constant 0 : i32
    %44 = arith.cmpi ne, %43, %c0_i32_22 : i32
    scf.if %44 {
      %c0_23 = arith.constant 0 : index
      %c0_24 = arith.constant 0 : index
      %45 = vector.load %arg7[%c0_23, %c0_24] : memref<16x128xf32, #tpu.memory_space<vmem>>, vector<16x128xf32>
      %c0_25 = arith.constant 0 : index
      %c0_26 = arith.constant 0 : index
      %46 = vector.load %arg6[%c0_25, %c0_26] : memref<1x128xf32, #tpu.memory_space<vmem>>, vector<1x128xf32>
      %47 = vector.broadcast %46 : vector<1x128xf32> to vector<16x128xf32>
      %48 = arith.addf %45, %47 : vector<16x128xf32>
      %cst_27 = arith.constant 1.000000e+00 : f32
      %49 = vector.broadcast %cst_27 : f32 to vector<16x128xf32>
      %50 = arith.mulf %49, %48 : vector<16x128xf32>
      %51 = math.tanh %50 : vector<16x128xf32>
      %c0_28 = arith.constant 0 : index
      %c0_29 = arith.constant 0 : index
      %52 = vector.load %arg7[%c0_28, %c0_29] : memref<16x128xf32, #tpu.memory_space<vmem>>, vector<16x128xf32>
      tpu.vector_store %arg7[%c0_28, %c0_29], %51 {strides = array<i32>} : memref<16x128xf32, #tpu.memory_space<vmem>>, vector<16x128xf32>,
    } else {
    }
    return
  }
  func.func @transform_0(%arg0: i32, %arg1: memref<1xi32, #tpu.memory_space<smem>>) -> (i32, i32) {
    %c0_i32 = arith.constant 0 : i32
    %c0_i32_0 = arith.constant 0 : i32
    %c0_i32_1 = arith.constant 0 : i32
    return %c0_i32, %c0_i32_0 : i32, i32
  }
  func.func @transform_1(%arg0: i32, %arg1: memref<1xi32, #tpu.memory_space<smem>>) -> (i32, i32) {
    %c0_i32 = arith.constant 0 : i32
    %c0_i32_0 = arith.constant 0 : i32
    return %c0_i32, %arg0 : i32, i32
  }
  func.func @transform_2(%arg0: i32, %arg1: memref<1xi32, #tpu.memory_space<smem>>) -> (i32, i32) {
    %c0_i32 = arith.constant 0 : i32
    %c0_i32_0 = arith.constant 0 : i32
    return %c0_i32, %arg0 : i32, i32
  }
  func.func @transform_3(%arg0: i32, %arg1: memref<1xi32, #tpu.memory_space<smem>>) -> (i32, i32) {
    %c0_i32 = arith.constant 0 : i32
    %c0_i32_0 = arith.constant 0 : i32
    return %arg0, %c0_i32 : i32, i32
  }
  func.func @transform_4(%arg0: i32, %arg1: memref<1xi32, #tpu.memory_space<smem>>) -> (i32, i32) {
    %c0_i32 = arith.constant 0 : i32
    %c0_i32_0 = arith.constant 0 : i32
    %c0_i32_1 = arith.constant 0 : i32
    return %c0_i32, %c0_i32_0 : i32, i32
  }
  func.func @transform_5(%arg0: i32, %arg1: memref<1xi32, #tpu.memory_space<smem>>) -> (i32, i32) {
    %c0_i32 = arith.constant 0 : i32
    %c0_i32_0 = arith.constant 0 : i32
    %c0_i32_1 = arith.constant 0 : i32
    return %c0_i32, %c0_i32_0 : i32, i32
  }
}

</mosaic_0001>

<llo_original>
// kernel: tpu_custom_call.1
$region0: #{tpu_custom_call.1}
  #allocation0 [shape = 'u32[]', space=smem, size = 0x4, offset = 0x4, fixed_abs, tag = 'smem constant byte address 0x4 - core index']
  #allocation1 [shape = 'u32[144,128]{1,0:T(1,128)}', space=vmem, size = 0x12000, scoped, tag = 'internal scratch']
  #allocation2 [shape = 'bf16[16,128]{1,0:T(8,128)(2,1)}', space=vmem, size = 0x1000, scoped, tag = 'scratch operand']
  #allocation3 [shape = 's32[1]{0}', space=sflag, size = 0x4, scoped, tag = 'scoped memory for tpu_custom_call.1']
  #allocation4 [shape = 's32[1]{0:T(128)S(6)}', space=smem, size = 0x200, scoped, tag = 'prefetched SMEM operand 0']
  %s0 = inlined_call_operand.<no memory space> [shape: s32[1], index: 0, kind: input, shape index: {}]
  %s1 = inlined_call_operand.hbm [shape: bf16[16,128], index: 1, kind: input, shape index: {}]
  %s2 = inlined_call_operand.hbm [shape: bf16[128,128], index: 2, kind: input, shape index: {}]
  %s3 = inlined_call_operand.vmem [shape: f32[2,128], index: 3, kind: input, shape index: {}]
  %s4 = inlined_call_operand.hbm [shape: bf16[128,128], index: 4, kind: input, shape index: {}]
  %s5 = inlined_call_operand.vmem [shape: f32[1,128], index: 5, kind: input, shape index: {}]
  %s6 = inlined_call_operand.hbm [shape: f32[16,128], index: 6, kind: output, shape index: {}]
  %s7 = sld [smem:[#allocation0]]
  $region50: #{tpu_custom_call.1} parent=0
    _
  %s9 = ssub.s32 1, %s7
  %s10 = scalar_select 0, %s9, %s7
  %11 = sst [smem:[#allocation4]] %s0
  $region1: #{tpu_custom_call.1} parent=0
    #allocation5 [shape = 'u8[4096]{0}', space=vmem, size = 0x1000, scoped, tag = 'input window, operand 1, single buffered']
    #allocation6 [shape = 's32[1]{0}', space=sflag, size = 0x4, scoped, tag = 'scoped memory for tpu_custom_call.1']
    #allocation7 [shape = 's32[1]{0}', space=sflag, size = 0x4, scoped, tag = 'scoped memory for tpu_custom_call.1']
    #allocation8 [shape = 'u8[32768]{0}', space=vmem, size = 0x8000, scoped, tag = 'input window, operand 2, single buffered']
    #allocation9 [shape = 's32[1]{0}', space=sflag, size = 0x4, scoped, tag = 'scoped memory for tpu_custom_call.1']
    #allocation10 [shape = 'u8[32768]{0}', space=vmem, size = 0x8000, scoped, tag = 'input window, operand 4, single buffered']
    #allocation11 [shape = 'u8[8192]{0}', space=vmem, size = 0x2000, scoped, tag = 'output window, operand 0, single buffered']
    %12 = vsyncpa [#allocation6], 0
    %13 = vsyncpa [#allocation9], 0
    %14 = vsyncpa [#allocation7], 0
    // Predicated region
    $region2: #{tpu_custom_call.1} parent=1 // pred_check
      _
    $region3: #{tpu_custom_call.1} parent=1 // pred_check_branch
      %16 = sbr.rel (0) target = $region5
    $region4: #{tpu_custom_call.1} parent=1 // pred_region
      %s18 = ssub.s32 128, 128
      %19 = vsyncadd [#allocation6], %s18
      %s20 = sshll.u32 [#allocation5], 4
      %s21 = int_to_ptr.vmem [resolvable:$true] %s20
      %26 = dma.hbm_to_vmem [thread:$0]  %s1, 128, %s21, [#allocation6], 64, 64, 4
    $region5: #{tpu_custom_call.1} parent=1 // pred_fallthru
      _
    // Predicated region
    $region6: #{tpu_custom_call.1} parent=1 // pred_check
      _
    $region7: #{tpu_custom_call.1} parent=1 // pred_check_branch
      %28 = sbr.rel (0) target = $region9
    $region8: #{tpu_custom_call.1} parent=1 // pred_region
      %s30 = ssub.s32 1024, 1024
      %31 = vsyncadd [#allocation9], %s30
      %s32 = sshll.u32 [#allocation8], 4
      %s33 = int_to_ptr.vmem [resolvable:$true] %s32
      %38 = dma.hbm_to_vmem [thread:$0]  %s2, 1024, %s33, [#allocation9], 64, 64, 4
    $region9: #{tpu_custom_call.1} parent=1 // pred_fallthru
      _
    // Predicated region
    $region10: #{tpu_custom_call.1} parent=1 // pred_check
      _
    $region11: #{tpu_custom_call.1} parent=1 // pred_check_branch
      %40 = sbr.rel (0) target = $region13
    $region12: #{tpu_custom_call.1} parent=1 // pred_region
      _
    $region13: #{tpu_custom_call.1} parent=1 // pred_fallthru
      _
    // Predicated region
    $region14: #{tpu_custom_call.1} parent=1 // pred_check
      _
    $region15: #{tpu_custom_call.1} parent=1 // pred_check_branch
      %42 = sbr.rel (0) target = $region17
    $region16: #{tpu_custom_call.1} parent=1 // pred_region
      %s44 = ssub.s32 1024, 1024
      %45 = vsyncadd [#allocation9], %s44
      %s46 = sshll.u32 [#allocation10], 4
      %s47 = int_to_ptr.vmem [resolvable:$true] %s46
      %52 = dma.hbm_to_vmem [thread:$0]  %s4, 1024, %s47, [#allocation9], 64, 64, 4
    $region17: #{tpu_custom_call.1} parent=1 // pred_fallthru
      _
    // Predicated region
    $region18: #{tpu_custom_call.1} parent=1 // pred_check
      _
    $region19: #{tpu_custom_call.1} parent=1 // pred_check_branch
      %54 = sbr.rel (0) target = $region21
    $region20: #{tpu_custom_call.1} parent=1 // pred_region
      _
    $region21: #{tpu_custom_call.1} parent=1 // pred_fallthru
      _
    // Predicated region
    $region22: #{tpu_custom_call.1} parent=1 // pred_check
      _
    $region23: #{tpu_custom_call.1} parent=1 // pred_check_branch
      %56 = sbr.rel (0) target = $region25
    $region24: #{tpu_custom_call.1} parent=1 // pred_region
      %57 = dma.done [#allocation6], 128
    $region25: #{tpu_custom_call.1} parent=1 // pred_fallthru
      _
    // Predicated region
    $region26: #{tpu_custom_call.1} parent=1 // pred_check
      _
    $region27: #{tpu_custom_call.1} parent=1 // pred_check_branch
      %59 = sbr.rel (0) target = $region29
    $region28: #{tpu_custom_call.1} parent=1 // pred_region
      %60 = dma.done [#allocation9], 1024
    $region29: #{tpu_custom_call.1} parent=1 // pred_fallthru
      _
    // Predicated region
    $region30: #{tpu_custom_call.1} parent=1 // pred_check
      _
    $region31: #{tpu_custom_call.1} parent=1 // pred_check_branch
      %62 = sbr.rel (0) target = $region33
    $region32: #{tpu_custom_call.1} parent=1 // pred_region
      %63 = dma.done [#allocation9], 1024
    $region33: #{tpu_custom_call.1} parent=1 // pred_fallthru
      _
    %p65 = scmp.eq.s32.totalorder 0, 0
    // Predicated region
    $region34: #{tpu_custom_call.1} parent=1 // pred_check
      %p66 = pneg %p65
    $region35: #{tpu_custom_call.1} parent=1 // pred_check_branch
      %68 = sbr.rel (%p66) target = $region37
    $region36: #{tpu_custom_call.1} parent=1 // pred_region
      %v69 = vld [vmem:[#allocation5] sm:$0xf]
      %v70 = vld [vmem:[#allocation5 + $0x4] sm:$0xf]
      %v71 = vunpack.c.l.bf16 %v69
      %v72 = vunpack.c.l.bf16 %v70
      %v73 = vmul.f32 %v71, %v71
      %v74 = vmul.f32 %v72, %v72
      %75 = vadd.xlane.f32.xlu0 %v73
      %v76 = vpop.xlane.xlu0 %75
      %77 = vadd.xlane.f32.xlu0 %v74
      %v78 = vpop.xlane.xlu0 %77
      %v79 = vmax.f32 %v76, 1e-24
      %v80 = vmax.f32 %v78, 1e-24
      %v81 = vrsqrt.pop %v79
      %v82 = vrsqrt.pop %v80
      %v83 = vmul.f32 %v71, %v81
      %v84 = vmul.f32 %v72, %v82
      %v85 = vpack.c.bf16 %v84, %v83
      %v87 = vunpack.c.l.b16 %v85
      %v88 = vunpack.c.h.b16 %v85
      %v89 = vpack.c.b16 %v87, %v87
      %v90 = vpack.c.b16 %v88, %v88
      %93 = vst [vmem:[#allocation2] sm:$0xf] %v89
      %94 = vst [vmem:[#allocation2 + $0x4] sm:$0xf] %v90
      %95 = vst [vmem:[#allocation11] sm:$0xff] 0.0
      %96 = vst [vmem:[#allocation11 + $0x8] sm:$0xff] 0.0
    $region37: #{tpu_custom_call.1} parent=1 // pred_fallthru
      _
    %v97 = vld [vmem:[#allocation2] sm:$0xf]
    %v98 = vld [vmem:[#allocation2 + $0x4] sm:$0xf]
    %v99 = vld [vmem:[#allocation8] sm:$0xf]
    %v100 = vld [vmem:[#allocation8 + $0x4] sm:$0xf]
    %v101 = vld [vmem:[#allocation8 + $0x8] sm:$0xf]
    %v102 = vld [vmem:[#allocation8 + $0xc] sm:$0xf]
    %v103 = vld [vmem:[#allocation8 + $0x10] sm:$0xf]
    %v104 = vld [vmem:[#allocation8 + $0x14] sm:$0xf]
    %v105 = vld [vmem:[#allocation8 + $0x18] sm:$0xf]
    %v106 = vld [vmem:[#allocation8 + $0x1c] sm:$0xf]
    %v107 = vld [vmem:[#allocation8 + $0x20] sm:$0xf]
    %v108 = vld [vmem:[#allocation8 + $0x24] sm:$0xf]
    %v109 = vld [vmem:[#allocation8 + $0x28] sm:$0xf]
    %v110 = vld [vmem:[#allocation8 + $0x2c] sm:$0xf]
    %v111 = vld [vmem:[#allocation8 + $0x30] sm:$0xf]
    %v112 = vld [vmem:[#allocation8 + $0x34] sm:$0xf]
    %v113 = vld [vmem:[#allocation8 + $0x38] sm:$0xf]
    %v114 = vld [vmem:[#allocation8 + $0x3c] sm:$0xf]
    %v117 = vunpack.c.l.b16 %v97
    %v118 = vunpack.c.l.b16 %v98
    %v119 = vpack.c.b16 %v118, %v117
    %v137 = vunpack.c.l.b16 %v99
    %v138 = vunpack.c.l.b16 %v100
    %v139 = vunpack.c.l.b16 %v101
    %v140 = vunpack.c.l.b16 %v102
    %v141 = vunpack.c.l.b16 %v103
    %v142 = vunpack.c.l.b16 %v104
    %v143 = vunpack.c.l.b16 %v105
    %v144 = vunpack.c.l.b16 %v106
    %v145 = vunpack.c.l.b16 %v107
    %v146 = vunpack.c.l.b16 %v108
    %v147 = vunpack.c.l.b16 %v109
    %v148 = vunpack.c.l.b16 %v110
    %v149 = vunpack.c.l.b16 %v111
    %v150 = vunpack.c.l.b16 %v112
    %v151 = vunpack.c.l.b16 %v113
    %v152 = vunpack.c.l.b16 %v114
    %v153 = vpack.c.b16 %v138, %v137
    %v154 = vpack.c.b16 %v140, %v139
    %v155 = vpack.c.b16 %v142, %v141
    %v156 = vpack.c.b16 %v144, %v143
    %v157 = vpack.c.b16 %v146, %v145
    %v158 = vpack.c.b16 %v148, %v147
    %v159 = vpack.c.b16 %v150, %v149
    %v160 = vpack.c.b16 %v152, %v151
    %169 = vmatprep.subr.bf16.mxu0 0
    %170 = vmatpush1.bf16.msra.mxu0 %v160
    %171 = vmatprep.subr.bf16.mxu0 0
    %172 = vmatpush1.bf16.msra.mxu0 %v159
    %173 = vmatprep.subr.bf16.mxu0 0
    %174 = vmatpush1.bf16.msra.mxu0 %v158
    %175 = vmatprep.subr.bf16.mxu0 0
    %176 = vmatpush1.bf16.msra.mxu0 %v157
    %177 = vmatprep.subr.bf16.mxu0 0
    %178 = vmatpush1.bf16.msra.mxu0 %v156
    %179 = vmatprep.subr.bf16.mxu0 0
    %180 = vmatpush1.bf16.msra.mxu0 %v155
    %181 = vmatprep.subr.bf16.mxu0 0
    %182 = vmatpush1.bf16.msra.mxu0 %v154
    %183 = vmatprep.subr.bf16.mxu0 0
    %184 = vmatpush1.bf16.msra.mxu0 %v153
    %185 = vmatprep.subr.bf16.mxu0 0
    %186 = vmatpush2.bf16.msra.mxu0 0
    %187 = vmatprep.subr.bf16.mxu0 0
    %188 = vmatpush2.bf16.msra.mxu0 0
    %189 = vmatprep.subr.bf16.mxu0 0
    %190 = vmatpush2.bf16.msra.mxu0 0
    %191 = vmatprep.subr.bf16.mxu0 0
    %192 = vmatpush2.bf16.msra.mxu0 0
    %193 = vmatprep.subr.bf16.mxu0 0
    %194 = vmatpush2.bf16.msra.mxu0 0
    %195 = vmatprep.subr.bf16.mxu0 0
    %196 = vmatpush2.bf16.msra.mxu0 0
    %197 = vmatprep.subr.bf16.mxu0 0
    %198 = vmatpush2.bf16.msra.mxu0 0
    %199 = vmatprep.subr.bf16.mxu0 0
    %200 = vmatpush2.bf16.msra.mxu0 0
    %201 = vmatprep.mubr.bf16.mxu0 0
    %202 = vmatmul.mubr.bf16.gmra.mxu0 %v119
    %v203 = vpop.f32.mrf.mxu0
    %v204 = vadd.f32 0.0, %v203
    %v205 = vpop.f32.mrf.mxu0
    %v206 = vpop.f32.mrf.mxu0
    %v207 = vadd.f32 0.0, %v206
    %v208 = vpop.f32.mrf.mxu0
    %209 = vdwg.mxu0
    %s210 = sld [smem:[#allocation4]]
    %s211 = scvt.s32.f32 %s210
    %v212 = vstv %s211
    %v213 = vrcp.pop %v212
    %s214 = vtos %v213
    %v215 = vadd.f32 %v204, %v207
    %v216 = vrot.slane %v215, 4
    %v217 = vadd.f32 %v215, %v216
    %v218 = vrot.slane %v217, 2
    %v219 = vadd.f32 %v217, %v218
    %v220 = vrot.slane %v219, 1
    %v221 = vadd.f32 %v219, %v220
    %v222 = vstv %s214
    %v223 = vmul.f32 %v221, %v222
    %v224 = vmul.f32 %v204, %v204
    %v225 = vmul.f32 %v207, %v207
    %v226 = vadd.f32 %v224, %v225
    %v227 = vrot.slane %v226, 4
    %v228 = vadd.f32 %v226, %v227
    %v229 = vrot.slane %v228, 2
    %v230 = vadd.f32 %v228, %v229
    %v231 = vrot.slane %v230, 1
    %v232 = vadd.f32 %v230, %v231
    %v233 = vmul.f32 %v232, %v222
    %v234 = vmul.f32 %v223, %v223
    %v235 = vsub.f32 %v233, %v234
    %v236 = vmax.f32 %v235, 0.0
    %v237 = vld [vmem:[%s3] sm:$0x1]
    %v238 = vadd.f32 %v236, 1e-05
    %v239 = vrsqrt.pop %v238
    %v240 = vmul.f32 %v237, %v239
    %v241 = vld [vmem:[%s3 + $0x1] sm:$0x1]
    %v242 = vmul.f32 %v223, %v240
    %v243 = vsub.f32 %v241, %v242
    %v244 = vlaneseq
    %v245 = vshrl.u32 %v244, 7
    %v246 = vsub.s32 0, %v245
    %v247 = vrot.slane %v240, %v246
    %v248 = vmul.f32 %v204, %v247
    %v249 = vmul.f32 %v207, %v247
    %v250 = vlaneseq
    %v251 = vshrl.u32 %v250, 7
    %v252 = vsub.s32 0, %v251
    %v253 = vrot.slane %v243, %v252
    %v254 = vadd.f32 %v248, %v253
    %v255 = vadd.f32 %v249, %v253
    %v256 = vmax.f32 %v254, 0.0
    %v257 = vmax.f32 %v255, 0.0
    %v258 = vld [vmem:[#allocation11] sm:$0xff]
    %v259 = vld [vmem:[#allocation11 + $0x8] sm:$0xff]
    %v260 = vpack.c.bf16 %v257, %v256
    %v261 = vld [vmem:[#allocation10] sm:$0xf]
    %v262 = vld [vmem:[#allocation10 + $0x4] sm:$0xf]
    %v263 = vld [vmem:[#allocation10 + $0x8] sm:$0xf]
    %v264 = vld [vmem:[#allocation10 + $0xc] sm:$0xf]
    %v265 = vld [vmem:[#allocation10 + $0x10] sm:$0xf]
    %v266 = vld [vmem:[#allocation10 + $0x14] sm:$0xf]
    %v267 = vld [vmem:[#allocation10 + $0x18] sm:$0xf]
    %v268 = vld [vmem:[#allocation10 + $0x1c] sm:$0xf]
    %v269 = vld [vmem:[#allocation10 + $0x20] sm:$0xf]
    %v270 = vld [vmem:[#allocation10 + $0x24] sm:$0xf]
    %v271 = vld [vmem:[#allocation10 + $0x28] sm:$0xf]
    %v272 = vld [vmem:[#allocation10 + $0x2c] sm:$0xf]
    %v273 = vld [vmem:[#allocation10 + $0x30] sm:$0xf]
    %v274 = vld [vmem:[#allocation10 + $0x34] sm:$0xf]
    %v275 = vld [vmem:[#allocation10 + $0x38] sm:$0xf]
    %v276 = vld [vmem:[#allocation10 + $0x3c] sm:$0xf]
    %v293 = vunpack.c.l.b16 %v261
    %v294 = vunpack.c.l.b16 %v262
    %v295 = vunpack.c.l.b16 %v263
    %v296 = vunpack.c.l.b16 %v264
    %v297 = vunpack.c.l.b16 %v265
    %v298 = vunpack.c.l.b16 %v266
    %v299 = vunpack.c.l.b16 %v267
    %v300 = vunpack.c.l.b16 %v268
    %v301 = vunpack.c.l.b16 %v269
    %v302 = vunpack.c.l.b16 %v270
    %v303 = vunpack.c.l.b16 %v271
    %v304 = vunpack.c.l.b16 %v272
    %v305 = vunpack.c.l.b16 %v273
    %v306 = vunpack.c.l.b16 %v274
    %v307 = vunpack.c.l.b16 %v275
    %v308 = vunpack.c.l.b16 %v276
    %v309 = vpack.c.b16 %v294, %v293
    %v310 = vpack.c.b16 %v296, %v295
    %v311 = vpack.c.b16 %v298, %v297
    %v312 = vpack.c.b16 %v300, %v299
    %v313 = vpack.c.b16 %v302, %v301
    %v314 = vpack.c.b16 %v304, %v303
    %v315 = vpack.c.b16 %v306, %v305
    %v316 = vpack.c.b16 %v308, %v307
    %325 = vmatprep.subr.bf16.mxu0 0
    %326 = vmatpush1.bf16.msra.mxu0 %v316
    %327 = vmatprep.subr.bf16.mxu0 0
    %328 = vmatpush1.bf16.msra.mxu0 %v315
    %329 = vmatprep.subr.bf16.mxu0 0
    %330 = vmatpush1.bf16.msra.mxu0 %v314
    %331 = vmatprep.subr.bf16.mxu0 0
    %332 = vmatpush1.bf16.msra.mxu0 %v313
    %333 = vmatprep.subr.bf16.mxu0 0
    %334 = vmatpush1.bf16.msra.mxu0 %v312
    %335 = vmatprep.subr.bf16.mxu0 0
    %336 = vmatpush1.bf16.msra.mxu0 %v311
    %337 = vmatprep.subr.bf16.mxu0 0
    %338 = vmatpush1.bf16.msra.mxu0 %v310
    %339 = vmatprep.subr.bf16.mxu0 0
    %340 = vmatpush1.bf16.msra.mxu0 %v309
    %341 = vmatprep.subr.bf16.mxu0 0
    %342 = vmatpush2.bf16.msra.mxu0 0
    %343 = vmatprep.subr.bf16.mxu0 0
    %344 = vmatpush2.bf16.msra.mxu0 0
    %345 = vmatprep.subr.bf16.mxu0 0
    %346 = vmatpush2.bf16.msra.mxu0 0
    %347 = vmatprep.subr.bf16.mxu0 0
    %348 = vmatpush2.bf16.msra.mxu0 0
    %349 = vmatprep.subr.bf16.mxu0 0
    %350 = vmatpush2.bf16.msra.mxu0 0
    %351 = vmatprep.subr.bf16.mxu0 0
    %352 = vmatpush2.bf16.msra.mxu0 0
    %353 = vmatprep.subr.bf16.mxu0 0
    %354 = vmatpush2.bf16.msra.mxu0 0
    %355 = vmatprep.subr.bf16.mxu0 0
    %356 = vmatpush2.bf16.msra.mxu0 0
    %357 = vmatprep.mubr.bf16.mxu0 0
    %358 = vmatmul.mubr.bf16.gmra.mxu0 %v260
    %v359 = vpop.f32.mrf.mxu0
    %v360 = vadd.f32 0.0, %v359
    %v361 = vpop.f32.mrf.mxu0
    %v362 = vpop.f32.mrf.mxu0
    %v363 = vadd.f32 0.0, %v362
    %v364 = vpop.f32.mrf.mxu0
    %365 = vdwg.mxu0
    %v366 = vadd.f32 %v258, %v360
    %v367 = vadd.f32 %v259, %v363
    %368 = vst [vmem:[#allocation11] sm:$0xff] %v366
    %369 = vst [vmem:[#allocation11 + $0x8] sm:$0xff] %v367
    // Predicated region
    $region38: #{tpu_custom_call.1} parent=1 // pred_check
      %p370 = pneg %p65
    $region39: #{tpu_custom_call.1} parent=1 // pred_check_branch
      %372 = sbr.rel (%p370) target = $region41
    $region40: #{tpu_custom_call.1} parent=1 // pred_region
      %v373 = vld [vmem:[#allocation11] sm:$0xff]
      %v374 = vld [vmem:[#allocation11 + $0x8] sm:$0xff]
      %v375 = vld [vmem:[%s5] sm:$0x1]
      %v377 = vlaneseq
      %v378 = vshrl.u32 %v377, 7
      %v379 = vsub.s32 0, %v378
      %v380 = vrot.slane %v375, %v379
      %v382 = vadd.f32 %v373, %v380
      %v383 = vadd.f32 %v374, %v380
      %v384 = vtanh.pop %v382
      %v385 = vtanh.pop %v383
      %386 = vst [vmem:[#allocation11] sm:$0xff] %v384
      %387 = vst [vmem:[#allocation11 + $0x8] sm:$0xff] %v385
    $region41: #{tpu_custom_call.1} parent=1 // pred_fallthru
      _
    // Predicated region
    $region42: #{tpu_custom_call.1} parent=1 // pred_check
      _
    $region43: #{tpu_custom_call.1} parent=1 // pred_check_branch
      %389 = sbr.rel (0) target = $region45
    $region44: #{tpu_custom_call.1} parent=1 // pred_region
      %s391 = ssub.s32 256, 256
      %392 = vsyncadd [#allocation7], %s391
      %s393 = sshll.u32 [#allocation11], 4
      %s394 = int_to_ptr.vmem [resolvable:$true] %s393
      %399 = dma.vmem_to_hbm [thread:$0]  %s394, 256, %s6, [#allocation7], 128, 128, 8
    $region45: #{tpu_custom_call.1} parent=1 // pred_fallthru
      _
    // Predicated region
    $region46: #{tpu_custom_call.1} parent=1 // pred_check
      _
    $region47: #{tpu_custom_call.1} parent=1 // pred_check_branch
      %401 = sbr.rel (0) target = $region49
    $region48: #{tpu_custom_call.1} parent=1 // pred_region
      %402 = dma.done [#allocation7], 256
    $region49: #{tpu_custom_call.1} parent=1 // pred_fallthru
      _
    %403 = vsyncpa [#allocation6], 1
    %404 = vsyncpa [#allocation9], 1
    %405 = vsyncpa [#allocation7], 1

</llo_original>
